<compile_context>
chip_gen: v7x
topology: tpu7x:2x2x1
jax: 0.10.0
libtpu: 0.0.40
codegen_flags: <defaults>
</compile_context>

<pallas_src>
import functools

import jax
import jax.numpy as jnp
from jax.experimental import pallas as pl
from jax.experimental.pallas import tpu as pltpu


_MIN_ROWS_PER_STEP = 2048  # below ~2k rows/step the 0.35us step overhead dominates the DMA


def _round_up(n, m):
    return ((n + m - 1) // m) * m


def _mlp_kernel(*refs, n_hidden):
    x_ref = refs[0]
    o_ref = refs[-1]
    p_refs = refs[1:-1]  # w1, b1, ..., wN, bN, wo, bo

    h = x_ref[...]
    for l in range(n_hidden):
        w_ref = p_refs[2 * l]
        b_ref = p_refs[2 * l + 1]
        # Linear -> ReLU (dropout = identity at inference).  MXU matmul in the weights'
        # dtype with f32 accumulation; bias/ReLU epilogue in f32 (v5e-safe).
        h = jnp.dot(h.astype(w_ref.dtype), w_ref[...],
                    preferred_element_type=jnp.float32)
        h = jnp.maximum(h + b_ref[...], 0.0)

    wo_ref = p_refs[-2]  # (H_last, 1) f32
    bo_ref = p_refs[-1]  # (1, 1) f32
    # Output layer (OUT == 1): canonical MXU contraction (lhs last dim x rhs first dim),
    # so no operand relayout/transpose is needed at large tile_b.  The (tb, 1) column
    # result is a masked single-lane store: 4*tb bytes/step of writeback, negligible.
    z = jnp.dot(h.astype(wo_ref.dtype), wo_ref[...],
                preferred_element_type=jnp.float32)
    o_ref[...] = jax.nn.sigmoid(z + bo_ref[...]).astype(o_ref.dtype)


@functools.partial(jax.jit,
                   static_argnames=("tile_b", "compute_dtype", "vmem_limit_bytes"))
def nn_classifier_binary_forward(x, params, *, tile_b=None, compute_dtype=None,
                                 vmem_limit_bytes=None):
    """params = [(w1, b1), ..., (wN, bN), (wo, bo)].

    Weights are stored transposed vs. PyTorch, i.e. (in_features, out_features); the
    output layer must have out_features == 1 (binary classifier, matches .squeeze(1)).
    Returns sigmoid probabilities of shape (B,) in float32.

    compute_dtype=jnp.bfloat16 casts the hidden-layer weights at trace time and the
    activations inside the kernel; pass x already stored as bf16 to also halve the
    dominant x HBM stream.  Valid on v5e/v6e/v7x (f32 accumulate + f32 epilogue).
    """
    B, IN = x.shape
    *hidden, (wo, bo) = params
    n_hidden = len(hidden)
    assert n_hidden >= 1
    assert wo.shape[-1] == 1, "binary classifier: output_size must be 1 (squeeze(1))"

    # ---- batch-tile choice ------------------------------------------------------------
    # Default: ~0.5-1 MiB of x per grid step (IN is small, so thousands of rows per tile).
    if tile_b is None:
        tile_b = 8192 if x.dtype == jnp.bfloat16 else 4096
    b_sub = 16 if x.dtype == jnp.bfloat16 else 8

    if B <= tile_b and B < 2 * _MIN_ROWS_PER_STEP:
        # Single grid step; round rows up to the sublane count only (block may be partial).
        tb = _round_up(B, b_sub)
    else:
        # >= 2 lane-aligned tiles: amortizes step overhead and feeds both v7x TensorCores
        # via dimension_semantics=("parallel",).  (v5e/v6e have 1 TC; harmless there.)
        tb = min(_round_up(tile_b, 128), _round_up(pl.cdiv(B, 2), 128))
    grid = (pl.cdiv(B, tb),)
    # NOTE: no jnp.pad of x.  When B % tb != 0 the last input block is partial: its
    # out-of-bounds rows hold unspecified VMEM data, but rows are independent (no
    # cross-row reduction) and the corresponding output rows lie outside the (B, 1)
    # output array, so they are never written back to HBM.

    # ---- flatten params (weights optionally bf16; biases & output layer stay f32) ------
    def full2d(r, c):
        return pl.BlockSpec((r, c), lambda i: (0, 0))  # grid-invariant, fetched once

    flat = []
    in_specs = [pl.BlockSpec((tb, IN), lambda i: (i, 0))]  # x: tiled over batch rows
    for (w, b) in hidden:
        w = w.astype(compute_dtype) if compute_dtype is not None else w
        b = b.reshape(1, -1).astype(jnp.float32)
        flat += [w, b]
        in_specs += [full2d(*w.shape), full2d(*b.shape)]
    wo_col = wo.reshape(-1, 1).astype(jnp.float32)  # (H_last, 1)
    bo_sc = bo.reshape(1, 1).astype(jnp.float32)    # (1, 1)
    flat += [wo_col, bo_sc]
    in_specs += [full2d(*wo_col.shape), full2d(1, 1)]

    out2d = pl.pallas_call(
        functools.partial(_mlp_kernel, n_hidden=n_hidden),
        out_shape=jax.ShapeDtypeStruct((B, 1), jnp.float32),
        grid_spec=pltpu.PrefetchScalarGridSpec(
            num_scalar_prefetch=0,
            grid=grid,
            in_specs=in_specs,
            out_specs=pl.BlockSpec((tb, 1), lambda i: (i, 0)),
        ),
        compiler_params=pltpu.CompilerParams(
            dimension_semantics=("parallel",),
            vmem_limit_bytes=vmem_limit_bytes,
        ),
    )(x, *flat)

    # .squeeze(1) from the PyTorch forward.
    return out2d[:, 0]


def _init_linear(key, fan_in, fan_out, dtype=jnp.float32):
    """PyTorch-style nn.Linear init (uniform +-1/sqrt(fan_in)); weight is (in, out)."""
    kw, kb = jax.random.split(key)
    bound = 1.0 / float(fan_in) ** 0.5
    w = jax.random.uniform(kw, (fan_in, fan_out), dtype, -bound, bound)
    b = jax.random.uniform(kb, (1, fan_out), dtype, -bound, bound)
    return w, b


def _reference_forward(x, params):
    *hidden, (wo, bo) = params
    h = x.astype(jnp.float32)
    for (w, b) in hidden:
        h = jnp.maximum(h @ w + b.reshape(1, -1), 0.0)
    return jax.nn.sigmoid(h @ wo + bo.reshape(1, -1))[:, 0]


if __name__ == "__main__":
    # Module config: NN_Classifier_binary(input_size=32, output_size=1, hidden_layers=[64, 32])
    INPUT_SIZE = 32
    HIDDEN = (64, 32)
    BATCH = 16

    keys = jax.random.split(jax.random.PRNGKey(0), 10)
    x = jax.random.normal(keys[0], (BATCH, INPUT_SIZE), jnp.float32)
    params = [
        _init_linear(keys[1], INPUT_SIZE, HIDDEN[0]),
        _init_linear(keys[2], HIDDEN[0], HIDDEN[1]),
        _init_linear(keys[3], HIDDEN[1], 1),
    ]

    # 1) f32, small batch -> single grid step.
    out = jax.block_until_ready(nn_classifier_binary_forward(x, params))
    ref = _reference_forward(x, params)
    assert out.shape == (BATCH,), out.shape
    assert jnp.allclose(out, ref, atol=1e-5, rtol=1e-5), "f32 mismatch"

    # 2) multi-step grid + ragged batch, no wrapper pad: B=300 with 128-row tiles
    #    -> 3 steps, partial last block (44 valid rows).
    x_big = jax.random.normal(keys[4], (300, INPUT_SIZE), jnp.float32)
    out_big = jax.block_until_ready(
        nn_classifier_binary_forward(x_big, params, tile_b=128))
    assert out_big.shape == (300,)
    assert jnp.allclose(out_big, _reference_forward(x_big, params),
                        atol=1e-5, rtol=1e-5), "multi-step mismatch"

    # 3) default tile policy at moderate B: 4500 rows -> 2 "parallel" steps of 2304 rows
    #    (v7x: one per TensorCore), last block partial.
    x_mid = jax.random.normal(keys[5], (4500, INPUT_SIZE), jnp.float32)
    out_mid = jax.block_until_ready(nn_classifier_binary_forward(x_mid, params))
    assert out_mid.shape == (4500,)
    assert jnp.allclose(out_mid, _reference_forward(x_mid, params),
                        atol=1e-5, rtol=1e-5), ">=2-step mismatch"

    # 4) deeper net (3 hidden layers, arbitrary nn.ModuleList) with a ragged batch of 13.
    params3 = [
        _init_linear(keys[6], INPUT_SIZE, 64),
        _init_linear(keys[7], 64, 48),
        _init_linear(keys[8], 48, 32),
        _init_linear(keys[9], 32, 1),
    ]
    x13 = x[:13]
    out13 = jax.block_until_ready(nn_classifier_binary_forward(x13, params3))
    assert out13.shape == (13,)
    assert jnp.allclose(out13, _reference_forward(x13, params3),
                        atol=1e-5, rtol=1e-5), "ragged/deep mismatch"

    # 5) bf16 x stored in HBM + bf16 hidden weights (real bandwidth saving); f32
    #    accumulation and f32 bias/ReLU/sigmoid epilogue (valid on v5e as well).
    out_bf16 = jax.block_until_ready(
        nn_classifier_binary_forward(x.astype(jnp.bfloat16), params,
                                     compute_dtype=jnp.bfloat16))
    assert out_bf16.shape == (BATCH,)
    assert jnp.allclose(out_bf16, ref, atol=5e-2, rtol=5e-2), "bf16 mismatch"

    print("KERNEL_OK")
</pallas_src>

<mosaic_0001>
module attributes {stable_mosaic.version = 11 : i64} {
  func.func @_mlp_kernel(%arg0: i32, %arg1: memref<16x32xf32, #tpu.memory_space<vmem>>, %arg2: memref<32x64xf32, #tpu.memory_space<vmem>>, %arg3: memref<1x64xf32, #tpu.memory_space<vmem>>, %arg4: memref<64x32xf32, #tpu.memory_space<vmem>>, %arg5: memref<1x32xf32, #tpu.memory_space<vmem>>, %arg6: memref<32x1xf32, #tpu.memory_space<vmem>>, %arg7: memref<1x1xf32, #tpu.memory_space<vmem>>, %arg8: memref<16x1xf32, #tpu.memory_space<vmem>>) attributes {dimension_semantics = [#tpu.dimension_semantics<parallel>], iteration_bounds = array<i64: 1>, scalar_prefetch = 0 : i64, scratch_operands = 0 : i64, tpu.core_type = #tpu.core_type<tc>, window_params = [{transform_indices = @transform_0, window_bounds = array<i64: 16, 32>}, {pipeline_mode = #tpu.pipeline_mode<synchronous>, transform_indices = @transform_1, window_bounds = array<i64: 32, 64>}, {pipeline_mode = #tpu.pipeline_mode<synchronous>, transform_indices = @transform_2, window_bounds = array<i64: 1, 64>}, {pipeline_mode = #tpu.pipeline_mode<synchronous>, transform_indices = @transform_3, window_bounds = array<i64: 64, 32>}, {pipeline_mode = #tpu.pipeline_mode<synchronous>, transform_indices = @transform_4, window_bounds = array<i64: 1, 32>}, {pipeline_mode = #tpu.pipeline_mode<synchronous>, transform_indices = @transform_5, window_bounds = array<i64: 32, 1>}, {pipeline_mode = #tpu.pipeline_mode<synchronous>, transform_indices = @transform_6, window_bounds = array<i64: 1, 1>}, {transform_indices = @transform_7, window_bounds = array<i64: 16, 1>}]} {
    %c0 = arith.constant 0 : index
    %c0_0 = arith.constant 0 : index
    %0 = vector.load %arg1[%c0, %c0_0] : memref<16x32xf32, #tpu.memory_space<vmem>>, vector<16x32xf32>
    %c0_1 = arith.constant 0 : index
    %c0_2 = arith.constant 0 : index
    %1 = vector.load %arg2[%c0_1, %c0_2] : memref<32x64xf32, #tpu.memory_space<vmem>>, vector<32x64xf32>
    %cst = arith.constant dense<0.000000e+00> : vector<16x64xf32>
    %2 = tpu.matmul %0, %1, %cst {dimension_numbers = #tpu.dot_dimension_numbers<[1], [0], [0], [1], [0, 0, 1, 1], [], []>} : vector<16x32xf32>, vector<32x64xf32>, vector<16x64xf32> -> vector<16x64xf32>
    %c0_3 = arith.constant 0 : index
    %c0_4 = arith.constant 0 : index
    %3 = vector.load %arg3[%c0_3, %c0_4] : memref<1x64xf32, #tpu.memory_space<vmem>>, vector<1x64xf32>
    %4 = vector.broadcast %3 : vector<1x64xf32> to vector<16x64xf32>
    %5 = arith.addf %2, %4 : vector<16x64xf32>
    %cst_5 = arith.constant 0.000000e+00 : f32
    %6 = vector.broadcast %cst_5 : f32 to vector<16x64xf32>
    %7 = arith.maximumf %5, %6 : vector<16x64xf32>
    %c0_6 = arith.constant 0 : index
    %c0_7 = arith.constant 0 : index
    %8 = vector.load %arg4[%c0_6, %c0_7] : memref<64x32xf32, #tpu.memory_space<vmem>>, vector<64x32xf32>
    %cst_8 = arith.constant dense<0.000000e+00> : vector<16x32xf32>
    %9 = tpu.matmul %7, %8, %cst_8 {dimension_numbers = #tpu.dot_dimension_numbers<[1], [0], [0], [1], [0, 0, 1, 1], [], []>} : vector<16x64xf32>, vector<64x32xf32>, vector<16x32xf32> -> vector<16x32xf32>
    %c0_9 = arith.constant 0 : index
    %c0_10 = arith.constant 0 : index
    %10 = vector.load %arg5[%c0_9, %c0_10] : memref<1x32xf32, #tpu.memory_space<vmem>>, vector<1x32xf32>
    %11 = vector.broadcast %10 : vector<1x32xf32> to vector<16x32xf32>
    %12 = arith.addf %9, %11 : vector<16x32xf32>
    %cst_11 = arith.constant 0.000000e+00 : f32
    %13 = vector.broadcast %cst_11 : f32 to vector<16x32xf32>
    %14 = arith.maximumf %12, %13 : vector<16x32xf32>
    %c0_12 = arith.constant 0 : index
    %c0_13 = arith.constant 0 : index
    %15 = vector.load %arg6[%c0_12, %c0_13] : memref<32x1xf32, #tpu.memory_space<vmem>>, vector<32x1xf32>
    %cst_14 = arith.constant dense<0.000000e+00> : vector<16x1xf32>
    %16 = tpu.matmul %14, %15, %cst_14 {dimension_numbers = #tpu.dot_dimension_numbers<[1], [0], [0], [1], [0, 0, 1, 1], [], []>} : vector<16x32xf32>, vector<32x1xf32>, vector<16x1xf32> -> vector<16x1xf32>
    %c0_15 = arith.constant 0 : index
    %c0_16 = arith.constant 0 : index
    %17 = vector.load %arg7[%c0_15, %c0_16] : memref<1x1xf32, #tpu.memory_space<vmem>>, vector<1x1xf32>
    %18 = vector.broadcast %17 : vector<1x1xf32> to vector<16x1xf32>
    %19 = arith.addf %16, %18 : vector<16x1xf32>
    %20 = arith.negf %19 : vector<16x1xf32>
    %21 = math.exp %20 : vector<16x1xf32>
    %cst_17 = arith.constant 1.000000e+00 : f32
    %22 = vector.broadcast %cst_17 : f32 to vector<16x1xf32>
    %23 = arith.addf %22, %21 : vector<16x1xf32>
    %24 = arith.divf %22, %23 : vector<16x1xf32>
    %c0_18 = arith.constant 0 : index
    %c0_19 = arith.constant 0 : index
    %25 = vector.load %arg8[%c0_18, %c0_19] : memref<16x1xf32, #tpu.memory_space<vmem>>, vector<16x1xf32>
    tpu.vector_store %arg8[%c0_18, %c0_19], %24 {strides = array<i32>} : memref<16x1xf32, #tpu.memory_space<vmem>>, vector<16x1xf32>,
    return
  }
  func.func @transform_0(%arg0: i32) -> (i32, i32) {
    %c0_i32 = arith.constant 0 : i32
    %c0_i32_0 = arith.constant 0 : i32
    return %arg0, %c0_i32 : i32, i32
  }
  func.func @transform_1(%arg0: i32) -> (i32, i32) {
    %c0_i32 = arith.constant 0 : i32
    %c0_i32_0 = arith.constant 0 : i32
    %c0_i32_1 = arith.constant 0 : i32
    return %c0_i32, %c0_i32_0 : i32, i32
  }
  func.func @transform_2(%arg0: i32) -> (i32, i32) {
    %c0_i32 = arith.constant 0 : i32
    %c0_i32_0 = arith.constant 0 : i32
    %c0_i32_1 = arith.constant 0 : i32
    return %c0_i32, %c0_i32_0 : i32, i32
  }
  func.func @transform_3(%arg0: i32) -> (i32, i32) {
    %c0_i32 = arith.constant 0 : i32
    %c0_i32_0 = arith.constant 0 : i32
    %c0_i32_1 = arith.constant 0 : i32
    return %c0_i32, %c0_i32_0 : i32, i32
  }
  func.func @transform_4(%arg0: i32) -> (i32, i32) {
    %c0_i32 = arith.constant 0 : i32
    %c0_i32_0 = arith.constant 0 : i32
    %c0_i32_1 = arith.constant 0 : i32
    return %c0_i32, %c0_i32_0 : i32, i32
  }
  func.func @transform_5(%arg0: i32) -> (i32, i32) {
    %c0_i32 = arith.constant 0 : i32
    %c0_i32_0 = arith.constant 0 : i32
    %c0_i32_1 = arith.constant 0 : i32
    return %c0_i32, %c0_i32_0 : i32, i32
  }
  func.func @transform_6(%arg0: i32) -> (i32, i32) {
    %c0_i32 = arith.constant 0 : i32
    %c0_i32_0 = arith.constant 0 : i32
    %c0_i32_1 = arith.constant 0 : i32
    return %c0_i32, %c0_i32_0 : i32, i32
  }
  func.func @transform_7(%arg0: i32) -> (i32, i32) {
    %c0_i32 = arith.constant 0 : i32
    %c0_i32_0 = arith.constant 0 : i32
    return %arg0, %c0_i32 : i32, i32
  }
}

</mosaic_0001>

<llo_original>
// kernel: nn_classifier_binary_forward.1
$region0: #{nn_classifier_binary_forward.1}
  #allocation0 [shape = 'u32[]', space=smem, size = 0x4, offset = 0x4, fixed_abs, tag = 'smem constant byte address 0x4 - core index']
  #allocation1 [shape = 'u32[144,128]{1,0:T(1,128)}', space=vmem, size = 0x12000, scoped, tag = 'internal scratch']
  #allocation2 [shape = 'f32[1,1]{1,0:T(1,128)S(1)}', space=vmem, size = 0x200, scoped, tag = 'scoped memory for nn_classifier_binary_forward.1']
  %s0 = inlined_call_operand.vmem [shape: f32[16,32], index: 0, kind: input, shape index: {}]
  %s1 = inlined_call_operand.vmem [shape: f32[32,64], index: 1, kind: input, shape index: {}]
  %s2 = inlined_call_operand.vmem [shape: f32[1,64], index: 2, kind: input, shape index: {}]
  %s3 = inlined_call_operand.vmem [shape: f32[64,32], index: 3, kind: input, shape index: {}]
  %s4 = inlined_call_operand.vmem [shape: f32[1,32], index: 4, kind: input, shape index: {}]
  %s5 = inlined_call_operand.vmem [shape: f32[32,1], index: 5, kind: input, shape index: {}]
  %s6 = inlined_call_operand.<no memory space> [shape: f32[1,1], index: 6, kind: input, shape index: {}]
  %s7 = inlined_call_operand.vmem [shape: f32[16,1], index: 7, kind: output, shape index: {}]
  %s8 = sld [smem:[#allocation0]]
  $region38: #{nn_classifier_binary_forward.1} parent=0
    _
  %s10 = ssub.s32 1, %s8
  %s11 = scalar_select 0, %s10, %s8
  %v12 = vstv %s6
  %13 = vst [vmem:[#allocation2] sm:$0x1] %v12
  // Predicated region
  $region2: #{nn_classifier_binary_forward.1} parent=0 // pred_check
    _
  $region3: #{nn_classifier_binary_forward.1} parent=0 // pred_check_branch
    %15 = sbr.rel (0) target = $region5
  $region4: #{nn_classifier_binary_forward.1} parent=0 // pred_region
    _
  $region5: #{nn_classifier_binary_forward.1} parent=0 // pred_fallthru
    _
  // Predicated region
  $region6: #{nn_classifier_binary_forward.1} parent=0 // pred_check
    _
  $region7: #{nn_classifier_binary_forward.1} parent=0 // pred_check_branch
    %17 = sbr.rel (0) target = $region9
  $region8: #{nn_classifier_binary_forward.1} parent=0 // pred_region
    _
  $region9: #{nn_classifier_binary_forward.1} parent=0 // pred_fallthru
    _
  // Predicated region
  $region10: #{nn_classifier_binary_forward.1} parent=0 // pred_check
    _
  $region11: #{nn_classifier_binary_forward.1} parent=0 // pred_check_branch
    %19 = sbr.rel (0) target = $region13
  $region12: #{nn_classifier_binary_forward.1} parent=0 // pred_region
    _
  $region13: #{nn_classifier_binary_forward.1} parent=0 // pred_fallthru
    _
  // Predicated region
  $region14: #{nn_classifier_binary_forward.1} parent=0 // pred_check
    _
  $region15: #{nn_classifier_binary_forward.1} parent=0 // pred_check_branch
    %21 = sbr.rel (0) target = $region17
  $region16: #{nn_classifier_binary_forward.1} parent=0 // pred_region
    _
  $region17: #{nn_classifier_binary_forward.1} parent=0 // pred_fallthru
    _
  // Predicated region
  $region18: #{nn_classifier_binary_forward.1} parent=0 // pred_check
    _
  $region19: #{nn_classifier_binary_forward.1} parent=0 // pred_check_branch
    %23 = sbr.rel (0) target = $region21
  $region20: #{nn_classifier_binary_forward.1} parent=0 // pred_region
    _
  $region21: #{nn_classifier_binary_forward.1} parent=0 // pred_fallthru
    _
  // Predicated region
  $region22: #{nn_classifier_binary_forward.1} parent=0 // pred_check
    _
  $region23: #{nn_classifier_binary_forward.1} parent=0 // pred_check_branch
    %25 = sbr.rel (0) target = $region25
  $region24: #{nn_classifier_binary_forward.1} parent=0 // pred_region
    _
  $region25: #{nn_classifier_binary_forward.1} parent=0 // pred_fallthru
    _
  // Predicated region
  $region26: #{nn_classifier_binary_forward.1} parent=0 // pred_check
    _
  $region27: #{nn_classifier_binary_forward.1} parent=0 // pred_check_branch
    %27 = sbr.rel (0) target = $region29
  $region28: #{nn_classifier_binary_forward.1} parent=0 // pred_region
    _
  $region29: #{nn_classifier_binary_forward.1} parent=0 // pred_fallthru
    _
  %v28 = vld [vmem:[%s0] sm:$0xff]
  %v29 = vld [vmem:[%s0 + $0x8] sm:$0xff]
  %v30 = vld [vmem:[%s1] sm:$0xff]
  %v31 = vld [vmem:[%s1 + $0x8] sm:$0xff]
  %v32 = vld [vmem:[%s1 + $0x10] sm:$0xff]
  %v33 = vld [vmem:[%s1 + $0x18] sm:$0xff]
  %v34 = vld [vmem:[%s2] sm:$0x1]
  %v36 = vlaneseq
  %v37 = vshrl.u32 %v36, 7
  %v38 = vsub.s32 0, %v37
  %v39 = vrot.slane %v34, %v38
  %vm41 = vcmask 261120
  %v43 = vsel %vm41, %v28, 0
  %v46 = vsel %vm41, %v29, 0
  %48 = vmatprep.subr.mxu0 0.0
  %49 = vmatpush1.msra.mxu0 %v30
  %50 = vmatprep.subr.mxu0 0.0
  %51 = vmatpush1.msra.mxu0 %v31
  %52 = vmatprep.subr.mxu0 0.0
  %53 = vmatpush1.msra.mxu0 %v32
  %54 = vmatprep.subr.mxu0 0.0
  %55 = vmatpush1.msra.mxu0 %v33
  %56 = vmatprep.subr.mxu0 0.0
  %57 = vmatpush1.msra.mxu0 0.0
  %58 = vmatprep.subr.mxu0 0.0
  %59 = vmatpush1.msra.mxu0 0.0
  %60 = vmatprep.subr.mxu0 0.0
  %61 = vmatpush1.msra.mxu0 0.0
  %62 = vmatprep.subr.mxu0 0.0
  %63 = vmatpush1.msra.mxu0 0.0
  %64 = vmatprep.subr.mxu0 0.0
  %65 = vmatpush1.msra.mxu0 0.0
  %66 = vmatprep.subr.mxu0 0.0
  %67 = vmatpush1.msra.mxu0 0.0
  %68 = vmatprep.subr.mxu0 0.0
  %69 = vmatpush1.msra.mxu0 0.0
  %70 = vmatprep.subr.mxu0 0.0
  %71 = vmatpush1.msra.mxu0 0.0
  %72 = vmatprep.subr.mxu0 0.0
  %73 = vmatpush1.msra.mxu0 0.0
  %74 = vmatprep.subr.mxu0 0.0
  %75 = vmatpush1.msra.mxu0 0.0
  %76 = vmatprep.subr.mxu0 0.0
  %77 = vmatpush1.msra.mxu0 0.0
  %78 = vmatprep.subr.mxu0 0.0
  %79 = vmatpush1.msra.mxu0 0.0
  %80 = vmatprep.subr.mxu0 0.0
  %81 = vmatpush1.msra.mxu0 0.0
  %82 = vmatprep.subr.mxu0 0.0
  %83 = vmatpush1.msra.mxu0 0.0
  %84 = vmatprep.subr.mxu0 0.0
  %85 = vmatpush1.msra.mxu0 0.0
  %86 = vmatprep.subr.mxu0 0.0
  %87 = vmatpush1.msra.mxu0 0.0
  %88 = vmatprep.subr.mxu0 0.0
  %89 = vmatpush1.msra.mxu0 0.0
  %90 = vmatprep.subr.mxu0 0.0
  %91 = vmatpush1.msra.mxu0 0.0
  %92 = vmatprep.subr.mxu0 0.0
  %93 = vmatpush1.msra.mxu0 0.0
  %94 = vmatprep.subr.mxu0 0.0
  %95 = vmatpush1.msra.mxu0 0.0
  %96 = vmatprep.subr.mxu0 0.0
  %97 = vmatpush1.msra.mxu0 0.0
  %98 = vmatprep.subr.mxu0 0.0
  %99 = vmatpush1.msra.mxu0 0.0
  %100 = vmatprep.subr.mxu0 0.0
  %101 = vmatpush1.msra.mxu0 0.0
  %102 = vmatprep.subr.mxu0 0.0
  %103 = vmatpush1.msra.mxu0 0.0
  %104 = vmatprep.subr.mxu0 0.0
  %105 = vmatpush1.msra.mxu0 0.0
  %106 = vmatprep.subr.mxu0 0.0
  %107 = vmatpush1.msra.mxu0 0.0
  %108 = vmatprep.subr.mxu0 0.0
  %109 = vmatpush1.msra.mxu0 0.0
  %110 = vmatprep.subr.mxu0 0.0
  %111 = vmatpush1.msra.mxu0 0.0
  %112 = vmatprep.mubr.f32.mxu0 0.0
  %113 = vmatmul.mubr.f32.gmra.mrb[0].mxu0 %v43
  %v114 = vpop.f32.mrb[0].mxu0
  %v115 = vadd.f32 %v39, %v114
  %v116 = vpop.f32.mrb[0].mxu0
  %117 = vmatprep.mubr.f32.mxu0 0.0
  %118 = vmatmul.mubr.f32.gmra.mrb[0].mxu0 %v46
  %v119 = vpop.f32.mrb[0].mxu0
  %v120 = vadd.f32 %v39, %v119
  %v121 = vpop.f32.mrb[0].mxu0
  %122 = vdwg.mxu0
  %v123 = vmax.f32 %v115, 0.0
  %v124 = vmax.f32 %v120, 0.0
  %v125 = vld [vmem:[%s3] sm:$0xff]
  %v126 = vld [vmem:[%s3 + $0x8] sm:$0xff]
  %v127 = vld [vmem:[%s3 + $0x10] sm:$0xff]
  %v128 = vld [vmem:[%s3 + $0x18] sm:$0xff]
  %v129 = vld [vmem:[%s3 + $0x20] sm:$0xff]
  %v130 = vld [vmem:[%s3 + $0x28] sm:$0xff]
  %v131 = vld [vmem:[%s3 + $0x30] sm:$0xff]
  %v132 = vld [vmem:[%s3 + $0x38] sm:$0xff]
  %v133 = vld [vmem:[%s4] sm:$0x1]
  %v135 = vlaneseq
  %v136 = vshrl.u32 %v135, 7
  %v137 = vsub.s32 0, %v136
  %v138 = vrot.slane %v133, %v137
  %vm140 = vcmask 523264
  %v142 = vsel %vm140, %v123, 0
  %v145 = vsel %vm140, %v124, 0
  %147 = vmatprep.subr.mxu0 0.0
  %148 = vmatpush1.msra.mxu0 %v125
  %149 = vmatprep.subr.mxu0 0.0
  %150 = vmatpush1.msra.mxu0 %v126
  %151 = vmatprep.subr.mxu0 0.0
  %152 = vmatpush1.msra.mxu0 %v127
  %153 = vmatprep.subr.mxu0 0.0
  %154 = vmatpush1.msra.mxu0 %v128
  %155 = vmatprep.subr.mxu0 0.0
  %156 = vmatpush1.msra.mxu0 %v129
  %157 = vmatprep.subr.mxu0 0.0
  %158 = vmatpush1.msra.mxu0 %v130
  %159 = vmatprep.subr.mxu0 0.0
  %160 = vmatpush1.msra.mxu0 %v131
  %161 = vmatprep.subr.mxu0 0.0
  %162 = vmatpush1.msra.mxu0 %v132
  %163 = vmatprep.subr.mxu0 0.0
  %164 = vmatpush1.msra.mxu0 0.0
  %165 = vmatprep.subr.mxu0 0.0
  %166 = vmatpush1.msra.mxu0 0.0
  %167 = vmatprep.subr.mxu0 0.0
  %168 = vmatpush1.msra.mxu0 0.0
  %169 = vmatprep.subr.mxu0 0.0
  %170 = vmatpush1.msra.mxu0 0.0
  %171 = vmatprep.subr.mxu0 0.0
  %172 = vmatpush1.msra.mxu0 0.0
  %173 = vmatprep.subr.mxu0 0.0
  %174 = vmatpush1.msra.mxu0 0.0
  %175 = vmatprep.subr.mxu0 0.0
  %176 = vmatpush1.msra.mxu0 0.0
  %177 = vmatprep.subr.mxu0 0.0
  %178 = vmatpush1.msra.mxu0 0.0
  %179 = vmatprep.subr.mxu0 0.0
  %180 = vmatpush1.msra.mxu0 0.0
  %181 = vmatprep.subr.mxu0 0.0
  %182 = vmatpush1.msra.mxu0 0.0
  %183 = vmatprep.subr.mxu0 0.0
  %184 = vmatpush1.msra.mxu0 0.0
  %185 = vmatprep.subr.mxu0 0.0
  %186 = vmatpush1.msra.mxu0 0.0
  %187 = vmatprep.subr.mxu0 0.0
  %188 = vmatpush1.msra.mxu0 0.0
  %189 = vmatprep.subr.mxu0 0.0
  %190 = vmatpush1.msra.mxu0 0.0
  %191 = vmatprep.subr.mxu0 0.0
  %192 = vmatpush1.msra.mxu0 0.0
  %193 = vmatprep.subr.mxu0 0.0
  %194 = vmatpush1.msra.mxu0 0.0
  %195 = vmatprep.subr.mxu0 0.0
  %196 = vmatpush1.msra.mxu0 0.0
  %197 = vmatprep.subr.mxu0 0.0
  %198 = vmatpush1.msra.mxu0 0.0
  %199 = vmatprep.subr.mxu0 0.0
  %200 = vmatpush1.msra.mxu0 0.0
  %201 = vmatprep.subr.mxu0 0.0
  %202 = vmatpush1.msra.mxu0 0.0
  %203 = vmatprep.subr.mxu0 0.0
  %204 = vmatpush1.msra.mxu0 0.0
  %205 = vmatprep.subr.mxu0 0.0
  %206 = vmatpush1.msra.mxu0 0.0
  %207 = vmatprep.subr.mxu0 0.0
  %208 = vmatpush1.msra.mxu0 0.0
  %209 = vmatprep.subr.mxu0 0.0
  %210 = vmatpush1.msra.mxu0 0.0
  %211 = vmatprep.mubr.f32.mxu0 0.0
  %212 = vmatmul.mubr.f32.gmra.mrb[0].mxu0 %v142
  %v213 = vpop.f32.mrb[0].mxu0
  %v214 = vadd.f32 %v138, %v213
  %v215 = vpop.f32.mrb[0].mxu0
  %216 = vmatprep.mubr.f32.mxu0 0.0
  %217 = vmatmul.mubr.f32.gmra.mrb[0].mxu0 %v145
  %v218 = vpop.f32.mrb[0].mxu0
  %v219 = vadd.f32 %v138, %v218
  %v220 = vpop.f32.mrb[0].mxu0
  %221 = vdwg.mxu0
  %v222 = vmax.f32 %v214, 0.0
  %v223 = vmax.f32 %v219, 0.0
  %v224 = vld [vmem:[%s5] sm:$0xff]
  %v225 = vld [vmem:[%s5 + $0x8] sm:$0xff]
  %v226 = vld [vmem:[%s5 + $0x10] sm:$0xff]
  %v227 = vld [vmem:[%s5 + $0x18] sm:$0xff]
  %v228 = vld [vmem:[#allocation2] sm:$0x1]
  %v230 = vlaneseq
  %v231 = vshrl.u32 %v230, 7
  %v232 = vsub.s32 0, %v231
  %v233 = vrot.slane %v228, %v232
  %v236 = vsel %vm41, %v222, 0
  %v239 = vsel %vm41, %v223, 0
  %241 = vmatprep.subr.mxu0 0.0
  %242 = vmatpush1.msra.mxu0 %v224
  %243 = vmatprep.subr.mxu0 0.0
  %244 = vmatpush1.msra.mxu0 %v225
  %245 = vmatprep.subr.mxu0 0.0
  %246 = vmatpush1.msra.mxu0 %v226
  %247 = vmatprep.subr.mxu0 0.0
  %248 = vmatpush1.msra.mxu0 %v227
  %249 = vmatprep.subr.mxu0 0.0
  %250 = vmatpush1.msra.mxu0 0.0
  %251 = vmatprep.subr.mxu0 0.0
  %252 = vmatpush1.msra.mxu0 0.0
  %253 = vmatprep.subr.mxu0 0.0
  %254 = vmatpush1.msra.mxu0 0.0
  %255 = vmatprep.subr.mxu0 0.0
  %256 = vmatpush1.msra.mxu0 0.0
  %257 = vmatprep.subr.mxu0 0.0
  %258 = vmatpush1.msra.mxu0 0.0
  %259 = vmatprep.subr.mxu0 0.0
  %260 = vmatpush1.msra.mxu0 0.0
  %261 = vmatprep.subr.mxu0 0.0
  %262 = vmatpush1.msra.mxu0 0.0
  %263 = vmatprep.subr.mxu0 0.0
  %264 = vmatpush1.msra.mxu0 0.0
  %265 = vmatprep.subr.mxu0 0.0
  %266 = vmatpush1.msra.mxu0 0.0
  %267 = vmatprep.subr.mxu0 0.0
  %268 = vmatpush1.msra.mxu0 0.0
  %269 = vmatprep.subr.mxu0 0.0
  %270 = vmatpush1.msra.mxu0 0.0
  %271 = vmatprep.subr.mxu0 0.0
  %272 = vmatpush1.msra.mxu0 0.0
  %273 = vmatprep.subr.mxu0 0.0
  %274 = vmatpush1.msra.mxu0 0.0
  %275 = vmatprep.subr.mxu0 0.0
  %276 = vmatpush1.msra.mxu0 0.0
  %277 = vmatprep.subr.mxu0 0.0
  %278 = vmatpush1.msra.mxu0 0.0
  %279 = vmatprep.subr.mxu0 0.0
  %280 = vmatpush1.msra.mxu0 0.0
  %281 = vmatprep.subr.mxu0 0.0
  %282 = vmatpush1.msra.mxu0 0.0
  %283 = vmatprep.subr.mxu0 0.0
  %284 = vmatpush1.msra.mxu0 0.0
  %285 = vmatprep.subr.mxu0 0.0
  %286 = vmatpush1.msra.mxu0 0.0
  %287 = vmatprep.subr.mxu0 0.0
  %288 = vmatpush1.msra.mxu0 0.0
  %289 = vmatprep.subr.mxu0 0.0
  %290 = vmatpush1.msra.mxu0 0.0
  %291 = vmatprep.subr.mxu0 0.0
  %292 = vmatpush1.msra.mxu0 0.0
  %293 = vmatprep.subr.mxu0 0.0
  %294 = vmatpush1.msra.mxu0 0.0
  %295 = vmatprep.subr.mxu0 0.0
  %296 = vmatpush1.msra.mxu0 0.0
  %297 = vmatprep.subr.mxu0 0.0
  %298 = vmatpush1.msra.mxu0 0.0
  %299 = vmatprep.subr.mxu0 0.0
  %300 = vmatpush1.msra.mxu0 0.0
  %301 = vmatprep.subr.mxu0 0.0
  %302 = vmatpush1.msra.mxu0 0.0
  %303 = vmatprep.subr.mxu0 0.0
  %304 = vmatpush1.msra.mxu0 0.0
  %305 = vmatprep.mubr.f32.mxu0 0.0
  %306 = vmatmul.mubr.f32.gmra.mrb[0].mxu0 %v236
  %v307 = vpop.f32.mrb[0].mxu0
  %v308 = vadd.f32 %v233, %v307
  %v309 = vpop.f32.mrb[0].mxu0
  %310 = vmatprep.mubr.f32.mxu0 0.0
  %311 = vmatmul.mubr.f32.gmra.mrb[0].mxu0 %v239
  %v312 = vpop.f32.mrb[0].mxu0
  %v313 = vadd.f32 %v233, %v312
  %v314 = vpop.f32.mrb[0].mxu0
  %315 = vdwg.mxu0
  %v316 = vxor.u32 %v308, 2147483648
  %v317 = vxor.u32 %v313, 2147483648
  %v318 = vmul.f32 %v316, 1.442695
  %v319 = vpow.pop %v318
  %v320 = vmul.f32 %v317, 1.442695
  %v321 = vpow.pop %v320
  %v322 = vadd.f32 %v319, 1.0
  %v323 = vadd.f32 %v321, 1.0
  %v324 = vrcp.pop %v322
  %v325 = vmul.f32 1.0, %v324
  %v326 = vrcp.pop %v323
  %v327 = vmul.f32 1.0, %v326
  %vm328 = vcmask 7168
  %329 = vst.msk [vmem:[%s7] sm:$0xff] %vm328, %v325
  %330 = vst.msk [vmem:[%s7 + $0x8] sm:$0xff] %vm328, %v327
  // Predicated region
  $region30: #{nn_classifier_binary_forward.1} parent=0 // pred_check
    _
  $region31: #{nn_classifier_binary_forward.1} parent=0 // pred_check_branch
    %332 = sbr.rel (0) target = $region33
  $region32: #{nn_classifier_binary_forward.1} parent=0 // pred_region
    _
  $region33: #{nn_classifier_binary_forward.1} parent=0 // pred_fallthru
    _
  // Predicated region
  $region34: #{nn_classifier_binary_forward.1} parent=0 // pred_check
    _
  $region35: #{nn_classifier_binary_forward.1} parent=0 // pred_check_branch
    %334 = sbr.rel (0) target = $region37
  $region36: #{nn_classifier_binary_forward.1} parent=0 // pred_region
    _
  $region37: #{nn_classifier_binary_forward.1} parent=0 // pred_fallthru
    _

</llo_original>
